<compile_context>
chip_gen: v5e
topology: v5e:2x2
jax: 0.10.0
libtpu: 0.0.40
codegen_flags: <defaults>
</compile_context>

<pallas_src>
import functools
import math

import jax
import jax.numpy as jnp
from jax.experimental import pallas as pl
from jax.experimental.pallas import tpu as pltpu

_LANE = 128                                   # vreg lane width
_WIDTH_CANDIDATES = (1024, 2048, 4096, 512, 256, 128)   # prefer lane-dense
_SHIFT = math.log(2.0)                        # torch.log(torch.tensor(2.0)).item()

# Transcendentals per element, for pl.CostEstimate.
_TRANSCENDENTALS = {
    'relu': 0, 'leaky_relu': 0,
    'sp': 2, 'leaky_sp': 2, 'ssp': 2, 'leaky_ssp': 2,
    'elu': 1, 'leaky_elu': 1,
    'tanh': 1, 'leaky_tanh': 1, 'swish': 1,
    'softsign': 1,
}


def _softplus_fast(x):
    # Numerically stable softplus matching F.softplus(beta=1, threshold=20).
    # The threshold select keeps the forward result finite even when the
    # discarded exp(x) branch overflows (relevant for the bf16 compute path).
    return jnp.where(x > 20.0, x, jnp.log1p(jnp.exp(x)))


def _act_math(xf, act, slope, shift):
    """Elementwise activation math, shared by the kernel, the jnp tail and tests."""
    if act == 'relu':
        return jnp.maximum(xf, 0.0)
    if act == 'leaky_relu':
        return jnp.where(xf >= 0, xf, 0.01 * xf)      # F.leaky_relu default slope
    if act == 'sp':
        return _softplus_fast(xf)
    if act == 'leaky_sp':
        return _softplus_fast(xf) - slope * jnp.maximum(-xf, 0.0)
    if act == 'elu':
        return jnp.where(xf > 0, xf, jnp.expm1(xf))
    if act == 'leaky_elu':
        return jnp.where(xf > 0, xf, jnp.expm1(xf)) - slope * jnp.maximum(-xf, 0.0)
    if act == 'ssp':
        return _softplus_fast(xf) - shift
    if act == 'leaky_ssp':
        return _softplus_fast(xf) - slope * jnp.maximum(-xf, 0.0) - shift
    if act == 'tanh':
        return jnp.tanh(xf)
    if act == 'leaky_tanh':
        return jnp.tanh(xf) + slope * xf
    if act == 'swish':
        # sigmoid(x) = 0.5*(tanh(x/2)+1): one EUP op instead of exp + divide.
        return (0.5 * (jnp.tanh(0.5 * xf) + 1.0)) * xf
    if act == 'softsign':
        # Exact divide: the kernel is HBM-bound, so the extra precision is free
        # and matches PyTorch's x / (1 + |x|).
        return xf / (1.0 + jnp.abs(xf))
    raise RuntimeError(f'Undefined activation called {act}')


def _act_kernel(x_ref, o_ref, *, act, slope, shift, compute_dtype):
    xf = x_ref[...].astype(compute_dtype)
    o_ref[...] = _act_math(xf, act, slope, shift).astype(o_ref.dtype)


def _tpu_generation_params():
    """Per-generation tuning: (target_block_bytes, bf16_native, min_grid)."""
    try:
        kind = jax.devices()[0].device_kind.lower()
    except Exception:
        kind = ""
    if "v7" in kind:
        # 3.2 TB/s HBM, 64 MiB VMEM, 2 TensorCores: large blocks, but keep the
        # parallel grid >= 8 so both cores get work.
        return 8 << 20, True, 8
    if "v6" in kind:
        return 6 << 20, True, 2
    # v5e and unknown / older chips: conservative blocks; no bf16 VPU/EUP on
    # v5e so compute stays in f32 there.
    return 3 << 20, False, 2


def _choose_layout(n128, itemsize, target_block_bytes, min_grid):
    """Pick (width, rows, block_rows) for a lane-dense 2D slab."""
    width = _LANE
    for w in _WIDTH_CANDIDATES:
        if n128 % w == 0:
            width = w
            break
    rows = n128 // width

    # Rows giving ~target_block_bytes per tile; the pipeline holds ~4x this
    # (input + output, each double-buffered).
    target_rows = max(8, target_block_bytes // (width * itemsize))
    # Keep the grid at >= min_grid steps when the tensor is big enough
    # (megacore sharding on v7x; DMA/compute overlap everywhere).
    target_rows = min(target_rows, max(8, pl.cdiv(rows, min_grid)))

    if target_rows >= rows:
        block_rows = rows
    elif target_rows >= 32:
        # 32-sublane alignment keeps bf16 (16 rows/vreg) and int8/fp8
        # (32 rows/vreg) blocks fully unmasked.
        block_rows = (target_rows // 32) * 32
    else:
        block_rows = (target_rows // 8) * 8
    return width, rows, block_rows


def _act_pallas_2d(x2d, act, slope, compute_dtype, block_rows, width,
                   vmem_limit, n_elems, itemsize):
    rows = x2d.shape[0]
    grid = pl.cdiv(rows, block_rows)
    kernel = functools.partial(_act_kernel, act=act, slope=float(slope),
                               shift=_SHIFT, compute_dtype=compute_dtype)
    cost = pl.CostEstimate(
        flops=4 * n_elems,
        transcendentals=_TRANSCENDENTALS[act] * n_elems,
        bytes_accessed=2 * n_elems * itemsize)
    return pl.pallas_call(
        kernel,
        out_shape=jax.ShapeDtypeStruct(x2d.shape, x2d.dtype),
        grid_spec=pltpu.PrefetchScalarGridSpec(
            num_scalar_prefetch=0,
            grid=(grid,),
            in_specs=[pl.BlockSpec((block_rows, width), lambda i: (i, 0))],
            out_specs=pl.BlockSpec((block_rows, width), lambda i: (i, 0)),
        ),
        compiler_params=pltpu.CompilerParams(
            dimension_semantics=("parallel",),
            vmem_limit_bytes=vmem_limit),
        cost_estimate=cost,
    )(x2d)


def act_pallas(x, act, slope=0.05):
    """Apply the `Act` activation elementwise via a Pallas TPU kernel."""
    orig_shape = x.shape
    orig_dtype = x.dtype
    total = int(math.prod(orig_shape)) if orig_shape else 1

    target_block_bytes, bf16_native, min_grid = _tpu_generation_params()

    # bf16-native compute keeps the single EUP slot from binding on v6e/v7x;
    # the cheap piecewise acts are always safe in bf16. v5e stays in f32.
    # (Note: bf16 arithmetic is a tiny deviation from PyTorch's f32 math.)
    if orig_dtype == jnp.bfloat16 and (bf16_native or act in ('relu', 'leaky_relu')):
        compute_dtype = jnp.bfloat16
    else:
        compute_dtype = jnp.float32

    flat = jnp.ravel(x)
    rem = total % _LANE
    main = total - rem

    if main == 0:
        # Degenerate (< 128 elements): a kernel launch is not worth it.
        out = _act_math(flat.astype(jnp.float32), act, float(slope), _SHIFT)
        return out.astype(orig_dtype).reshape(orig_shape)

    itemsize = jnp.dtype(orig_dtype).itemsize
    width, rows, block_rows = _choose_layout(main, itemsize,
                                             target_block_bytes, min_grid)
    block_bytes = block_rows * width * itemsize
    vmem_limit = int(min(48 << 20, max(16 << 20, 4 * block_bytes + (4 << 20))))

    x2d = (flat if rem == 0 else flat[:main]).reshape(rows, width)
    out2d = _act_pallas_2d(x2d, act, slope, compute_dtype, block_rows, width,
                           vmem_limit, main, itemsize)
    out_main = out2d.reshape(-1)

    if rem:
        # <=127-element tail handled with plain jnp: avoids the full-tensor
        # padding concatenate before the kernel. The rem == 0 common path has
        # zero extra copies.
        tail = _act_math(flat[main:].astype(jnp.float32), act, float(slope),
                         _SHIFT).astype(orig_dtype)
        out_flat = jnp.concatenate([out_main, tail])
    else:
        out_flat = out_main
    return out_flat.reshape(orig_shape)


def _act_ref(x, act, slope=0.05):
    # Pure-JAX reference mirroring the PyTorch forward (independent formulation).
    xf = x.astype(jnp.float32)
    if act == 'relu':
        y = jnp.maximum(xf, 0.0)
    elif act == 'leaky_relu':
        y = jnp.where(xf >= 0, xf, 0.01 * xf)
    elif act == 'sp':
        y = jnp.logaddexp(xf, 0.0)
    elif act == 'leaky_sp':
        y = jnp.logaddexp(xf, 0.0) - slope * jnp.maximum(-xf, 0.0)
    elif act == 'elu':
        y = jnp.where(xf > 0, xf, jnp.expm1(xf))
    elif act == 'leaky_elu':
        y = jnp.where(xf > 0, xf, jnp.expm1(xf)) - slope * jnp.maximum(-xf, 0.0)
    elif act == 'ssp':
        y = jnp.logaddexp(xf, 0.0) - _SHIFT
    elif act == 'leaky_ssp':
        y = jnp.logaddexp(xf, 0.0) - slope * jnp.maximum(-xf, 0.0) - _SHIFT
    elif act == 'tanh':
        y = jnp.tanh(xf)
    elif act == 'leaky_tanh':
        y = jnp.tanh(xf) + slope * xf
    elif act == 'swish':
        y = jax.nn.sigmoid(xf) * xf
    elif act == 'softsign':
        y = xf / (1.0 + jnp.abs(xf))
    else:
        raise RuntimeError(f'Undefined activation called {act}')
    return y.astype(x.dtype)


if __name__ == "__main__":
    key = jax.random.PRNGKey(0)
    # Small NCHW input, consistent with the conv-style usage in train.py.
    x = jax.random.normal(key, (2, 4, 16, 16), dtype=jnp.float32) * 3.0

    acts = ['relu', 'leaky_relu', 'sp', 'leaky_sp', 'elu', 'leaky_elu',
            'ssp', 'leaky_ssp', 'tanh', 'leaky_tanh', 'swish', 'softsign']

    for a in acts:
        out = jax.block_until_ready(act_pallas(x, a))
        ref = _act_ref(x, a)
        assert out.shape == x.shape and out.dtype == x.dtype
        if not jnp.allclose(out, ref, atol=1e-5, rtol=1e-5):
            raise AssertionError(f"mismatch for act={a}")

    # Exercise the (rare) non-128-divisible path (prefix kernel + jnp tail).
    x_odd = jax.random.normal(jax.random.PRNGKey(1), (3, 5, 7, 11),
                              dtype=jnp.float32) * 3.0
    out_odd = jax.block_until_ready(act_pallas(x_odd, 'ssp'))
    if not jnp.allclose(out_odd, _act_ref(x_odd, 'ssp'), atol=1e-5, rtol=1e-5):
        raise AssertionError("mismatch for odd-shaped ssp")

    # Exercise the bf16 paths (piecewise and transcendental).
    x_bf = x.astype(jnp.bfloat16)
    for a in ('leaky_relu', 'swish', 'ssp'):
        out_bf = jax.block_until_ready(act_pallas(x_bf, a))
        ref_bf = _act_ref(x_bf, a)
        if not jnp.allclose(out_bf.astype(jnp.float32),
                            ref_bf.astype(jnp.float32),
                            atol=3e-2, rtol=3e-2):
            raise AssertionError(f"mismatch for bf16 {a}")

    print("KERNEL_OK")
</pallas_src>

<mosaic_0001>
module attributes {stable_mosaic.version = 11 : i64} {
  func.func @_act_kernel(%arg0: i32, %arg1: memref<2x1024xf32, #tpu.memory_space<vmem>>, %arg2: memref<2x1024xf32, #tpu.memory_space<vmem>>) attributes {dimension_semantics = [#tpu.dimension_semantics<parallel>], iteration_bounds = array<i64: 1>, scalar_prefetch = 0 : i64, scratch_operands = 0 : i64, tpu.core_type = #tpu.core_type<tc>, window_params = [{transform_indices = @transform_0, window_bounds = array<i64: 2, 1024>}, {transform_indices = @transform_1, window_bounds = array<i64: 2, 1024>}]} {
    %c0 = arith.constant 0 : index
    %c0_0 = arith.constant 0 : index
    %0 = vector.load %arg1[%c0, %c0_0] : memref<2x1024xf32, #tpu.memory_space<vmem>>, vector<2x1024xf32>
    %cst = arith.constant 0.000000e+00 : f32
    %1 = vector.broadcast %cst : f32 to vector<2x1024xf32>
    %2 = arith.maximumf %0, %1 : vector<2x1024xf32>
    %c0_1 = arith.constant 0 : index
    %c0_2 = arith.constant 0 : index
    %3 = vector.load %arg2[%c0_1, %c0_2] : memref<2x1024xf32, #tpu.memory_space<vmem>>, vector<2x1024xf32>
    tpu.vector_store %arg2[%c0_1, %c0_2], %2 {strides = array<i32>} : memref<2x1024xf32, #tpu.memory_space<vmem>>, vector<2x1024xf32>,
    return
  }
  func.func @transform_0(%arg0: i32) -> (i32, i32) {
    %c0_i32 = arith.constant 0 : i32
    %c0_i32_0 = arith.constant 0 : i32
    return %arg0, %c0_i32 : i32, i32
  }
  func.func @transform_1(%arg0: i32) -> (i32, i32) {
    %c0_i32 = arith.constant 0 : i32
    %c0_i32_0 = arith.constant 0 : i32
    return %arg0, %c0_i32 : i32, i32
  }
}

</mosaic_0001>

<llo_original>
// kernel: tpu_custom_call.1
$region0: #{tpu_custom_call.1}
  #allocation0 [shape = 'u32[]', space=smem, size = 0x4, offset = 0x4, fixed_abs, tag = 'smem constant byte address 0x4 - core index']
  #allocation1 [shape = 'u32[72,128]{1,0:T(1,128)}', space=vmem, size = 0x9000, scoped, tag = 'internal scratch']
  %s0 = inlined_call_operand.hbm [shape: f32[2,1024], index: 0, kind: input, shape index: {}]
  %s1 = inlined_call_operand.hbm [shape: f32[2,1024], index: 1, kind: output, shape index: {}]
  %s2 = sld [smem:[#allocation0]]
  $region18: #{tpu_custom_call.1} parent=0
    _
  %s4 = ssub.s32 1, %s2
  %s5 = scalar_select 0, %s4, %s2
  $region1: #{tpu_custom_call.1} parent=0
    #allocation2 [shape = 'u8[8192]{0}', space=vmem, size = 0x2000, scoped, tag = 'input window, operand 0, single buffered']
    #allocation3 [shape = 's32[1]{0}', space=sflag, size = 0x4, scoped, tag = 'scoped memory for tpu_custom_call.1']
    #allocation4 [shape = 's32[1]{0}', space=sflag, size = 0x4, scoped, tag = 'scoped memory for tpu_custom_call.1']
    #allocation5 [shape = 'u8[8192]{0}', space=vmem, size = 0x2000, scoped, tag = 'output window, operand 0, single buffered']
    %6 = vsyncpa [#allocation3], 0
    %7 = vsyncpa [#allocation4], 0
    // Predicated region
    $region2: #{tpu_custom_call.1} parent=1 // pred_check
      _
    $region3: #{tpu_custom_call.1} parent=1 // pred_check_branch
      %9 = sbr.rel (0) target = $region5
    $region4: #{tpu_custom_call.1} parent=1 // pred_region
      %11 = vsyncadd [#allocation3], 0
      %s13 = sshll.u32 %s0, 4
      %s14 = int_to_ptr.hbm [resolvable:$true] %s13
      %s15 = sshll.u32 [#allocation2], 4
      %s16 = int_to_ptr.vmem [resolvable:$true] %s15
      %18 = dma.hbm_to_vmem [thread:$0]  %s14, 256, %s16, [#allocation3]
    $region5: #{tpu_custom_call.1} parent=1 // pred_fallthru
      _
    // Predicated region
    $region6: #{tpu_custom_call.1} parent=1 // pred_check
      _
    $region7: #{tpu_custom_call.1} parent=1 // pred_check_branch
      %20 = sbr.rel (0) target = $region9
    $region8: #{tpu_custom_call.1} parent=1 // pred_region
      %22 = dma.done [#allocation3], 256
    $region9: #{tpu_custom_call.1} parent=1 // pred_fallthru
      _
    %v23 = vld [vmem:[#allocation2] sm:$0xff]
    %v24 = vld [vmem:[#allocation2 + $0x8] sm:$0xff]
    %v25 = vmax.f32 %v23, 0.0
    %v26 = vmax.f32 %v24, 0.0
    %27 = vst [vmem:[#allocation5] sm:$0xff] %v25
    %28 = vst [vmem:[#allocation5 + $0x8] sm:$0xff] %v26
    // Predicated region
    $region10: #{tpu_custom_call.1} parent=1 // pred_check
      _
    $region11: #{tpu_custom_call.1} parent=1 // pred_check_branch
      %30 = sbr.rel (0) target = $region13
    $region12: #{tpu_custom_call.1} parent=1 // pred_region
      %32 = vsyncadd [#allocation4], 0
      %s34 = sshll.u32 [#allocation5], 4
      %s35 = int_to_ptr.vmem [resolvable:$true] %s34
      %s36 = sshll.u32 %s1, 4
      %s37 = int_to_ptr.hbm [resolvable:$true] %s36
      %39 = dma.vmem_to_hbm [thread:$0]  %s35, 256, %s37, [#allocation4]
    $region13: #{tpu_custom_call.1} parent=1 // pred_fallthru
      _
    // Predicated region
    $region14: #{tpu_custom_call.1} parent=1 // pred_check
      _
    $region15: #{tpu_custom_call.1} parent=1 // pred_check_branch
      %41 = sbr.rel (0) target = $region17
    $region16: #{tpu_custom_call.1} parent=1 // pred_region
      %43 = dma.done [#allocation4], 256
    $region17: #{tpu_custom_call.1} parent=1 // pred_fallthru
      _
    %44 = vsyncpa [#allocation3], 1
    %45 = vsyncpa [#allocation4], 1

</llo_original>
